<compile_context>
chip_gen: v6e
topology: v6e:2x2x1
jax: 0.10.0
libtpu: 0.0.40
codegen_flags: <defaults>
</compile_context>

<pallas_src>
import math
from functools import partial

import jax
import jax.numpy as jnp
from jax.experimental import pallas as pl
from jax.experimental.pallas import tpu as pltpu


# ---------------------------------------------------------------------------
# Parameter construction (mirrors init_kernel(..., num_fft=frame_len, is_fft=False))
# ---------------------------------------------------------------------------
def init_dft_matrix(frame_len: int, frame_hop: int) -> jnp.ndarray:
    """Returns dft_matrix of shape (frame_len, fft_size+2) with fft_size=frame_len."""
    n = jnp.arange(frame_len, dtype=jnp.float32)
    # torch.hann_window(N) (periodic) ** 0.5
    window = jnp.sqrt(0.5 * (1.0 - jnp.cos(2.0 * jnp.pi * n / frame_len)))
    s_ = 0.5 * (frame_len / frame_hop) ** 0.5
    w = jnp.fft.rfft(jnp.eye(frame_len, dtype=jnp.float32) / s_, axis=-1)  # (K, F) complex
    dm = jnp.stack([w.real, w.imag], axis=-1)                              # (K, F, 2)
    dm = jnp.transpose(dm, (2, 1, 0)) * window                             # (2, F, K)
    fft_size = frame_len
    return dm.reshape(fft_size + 2, frame_len).T.astype(jnp.float32)       # (K, 2F)


def _round_up(v, n):
    return ((int(v) + n - 1) // n) * n


# ---------------------------------------------------------------------------
# Pallas kernel: one (batch, frame-tile) step = vectorized enframe + DFT matmuls
# ---------------------------------------------------------------------------
def _enframe_stft_kernel(x_ref, tail_ref, dre_ref, dim_ref, frame_ref, stft_ref,
                         *, K, hop, m):
    # x_ref:     (1, tT, hop)            hop-sample rows for this tile
    # tail_ref:  (1, 1, m-1|1, hop)      first m-1 rows of the next tile's window
    # dre_ref:   (K, F)                  real DFT columns (grid-resident)
    # dim_ref:   (K, F)                  imag DFT columns (grid-resident)
    # frame_ref: (1, tT, K)              enframed output tile
    # stft_ref:  (1, 2, tT, F)           STFT output tile (final layout)
    acc_re = None
    acc_im = None
    for j in range(m):
        w = min(hop, K - j * hop)
        if j == 0:
            chunk = x_ref[0, :, 0:w]                                   # (tT, w)
        else:
            # window rows j .. j+tT-1 = main rows j.. ++ first j overlap rows
            chunk = jnp.concatenate(
                [x_ref[0, j:, 0:w], tail_ref[0, 0, 0:j, 0:w]], axis=0)  # (tT, w)
        # frames[:, j*hop : j*hop+w] is exactly this chunk (identity conv = copy)
        frame_ref[0, :, j * hop:j * hop + w] = chunk
        # accumulate the DFT matmul per chunk (MXU is idle at these shapes)
        pre = jnp.dot(chunk, dre_ref[j * hop:j * hop + w, :],
                      preferred_element_type=jnp.float32)
        pim = jnp.dot(chunk, dim_ref[j * hop:j * hop + w, :],
                      preferred_element_type=jnp.float32)
        acc_re = pre if acc_re is None else acc_re + pre
        acc_im = pim if acc_im is None else acc_im + pim
    stft_ref[0, 0, :, :] = acc_re
    stft_ref[0, 1, :, :] = acc_im


# ---------------------------------------------------------------------------
# Wrapper
# ---------------------------------------------------------------------------
def _vmem_block_bytes(tT, hop, K, F, tail_rows):
    lane = lambda v: _round_up(v, 128)
    sub = lambda v: _round_up(max(v, 1), 8)
    elems = (sub(tT) * lane(hop)              # x window rows
             + sub(tail_rows) * lane(hop)     # overlap rows
             + 2 * sub(K) * lane(F)           # dft real + imag
             + sub(tT) * lane(K)              # frame output tile
             + 2 * sub(tT) * lane(F))         # stft output tile
    return 4 * elems                          # f32


def _pick_frames_per_tile(T, B, requested):
    tT = max(8, (int(requested) // 8) * 8)
    tT = min(tT, _round_up(T, 8))
    # spread T evenly over the same number of tiles (less padded-frame waste)
    n = pl.cdiv(T, tT)
    tT = min(_round_up(pl.cdiv(T, n), 8), _round_up(T, 8))
    # keep >= ~4 grid steps so v7x's two TensorCores stay busy (no-op elsewhere)
    while B * pl.cdiv(T, tT) < 4 and tT > 128:
        tT = max(8, _round_up(pl.cdiv(tT, 2), 8))
    return tT


def conv_enframe(x, dft_matrix, frame_len, frame_hop, *, frames_per_tile=1024):
    """Forward pass of ConvEnframe.

    x: (B, L) or (B, 1, L)
    returns (frame_x (B,T,K), stft_x (B,2,T,F), dft_matrix (K,2F))
    """
    if x.ndim == 3 and x.shape[1] == 1:
        x = x[:, 0, :]
    if x.ndim != 2:
        raise RuntimeError("Expect (B,L) or (B,1,L) input")
    # TODO(synk): STFTBase.check_nan() host-side NaN guard on the conv kernel is omitted.
    x = x.astype(jnp.float32)
    dft = dft_matrix.astype(jnp.float32)

    B, L = x.shape
    K, hop = int(frame_len), int(frame_hop)
    two_f = dft.shape[1]
    F = two_f // 2
    assert dft.shape[0] == K and two_f == K + 2, "dft_matrix must be (K, K+2)"
    if L < K:
        raise RuntimeError("signal shorter than one frame")

    T = (L - K) // hop + 1                    # frames; trailing samples dropped (= F.conv1d)
    m = pl.cdiv(K, hop)                       # hop-rows per frame
    tail_rows = max(m - 1, 1)

    tT = _pick_frames_per_tile(T, B, frames_per_tile)

    # --- VMEM budget: (8,128)-padded blocks, double-buffered, gen-aware cap ---
    try:
        cap = int(getattr(pltpu.get_tpu_info(), "vmem_capacity_bytes", 0)) or (128 << 20)
    except Exception:
        cap = 128 << 20
    budget = int(cap * 0.70)                  # ~90 MiB v5e/v6e, ~45 MiB v7x
    while 2 * _vmem_block_bytes(tT, hop, K, F, tail_rows) + (4 << 20) > budget and tT > 8:
        tT = max(8, _round_up(tT // 2, 8))
    need = 2 * _vmem_block_bytes(tT, hop, K, F, tail_rows)
    vmem_limit = int(min(budget, max(need + (8 << 20), 32 << 20)))

    t_grid = pl.cdiv(T, tT)

    # --- hop-sample row view of x (no copy when it already lines up) ---------
    # Only rows touched by real frames must exist; the last tile may read past
    # the end (unspecified values) which only feeds frames >= T whose output
    # writes are dropped.
    rows_real = T + (K - 1) // hop
    if L % hop == 0 and L // hop >= rows_real:
        x_rows = x.reshape(B, L // hop, hop)              # free reshape, no copy
    else:
        l_need = rows_real * hop
        x_use = x[:, :l_need] if l_need <= L else jnp.pad(x, ((0, 0), (0, l_need - L)))
        x_rows = x_use.reshape(B, rows_real, hop)
    R = x_rows.shape[1]

    # Overlap rows per tile: first (m-1) rows of the next tile's window, gathered
    # host-side (reads only ~(m-1)/tT of x; clamped indices only affect frames >= T).
    tail_idx = jnp.minimum(
        (jnp.arange(t_grid)[:, None] + 1) * tT + jnp.arange(tail_rows)[None, :],
        R - 1)
    x_tail = jnp.take(x_rows, tail_idx, axis=1)           # (B, t_grid, tail_rows, hop)

    dft_re = dft[:, :F]                                   # (K, F)
    dft_im = dft[:, F:]                                   # (K, F)

    kernel = partial(_enframe_stft_kernel, K=K, hop=hop, m=m)

    frame_x, stft_x = pl.pallas_call(
        kernel,
        out_shape=(jax.ShapeDtypeStruct((B, T, K), jnp.float32),
                   jax.ShapeDtypeStruct((B, 2, T, F), jnp.float32)),
        grid_spec=pltpu.PrefetchScalarGridSpec(
            num_scalar_prefetch=0,
            grid=(B, t_grid),
            in_specs=[
                # per-tile window rows (VMEM use independent of L)
                pl.BlockSpec((1, tT, hop), lambda b, t: (b, t, 0)),
                # per-tile overlap rows
                pl.BlockSpec((1, 1, tail_rows, hop), lambda b, t: (b, t, 0, 0)),
                # DFT matrices, resident across the whole grid
                pl.BlockSpec((K, F), lambda b, t: (0, 0)),
                pl.BlockSpec((K, F), lambda b, t: (0, 0)),
            ],
            out_specs=(
                pl.BlockSpec((1, tT, K), lambda b, t: (b, t, 0)),
                pl.BlockSpec((1, 2, tT, F), lambda b, t: (b, 0, t, 0)),
            ),
        ),
        compiler_params=pltpu.CompilerParams(
            dimension_semantics=("parallel", "parallel"),
            vmem_limit_bytes=vmem_limit),
    )(x_rows, x_tail, dft_re, dft_im)

    return frame_x, stft_x, dft


# ---------------------------------------------------------------------------
# Pure-JAX reference (for correctness checking only)
# ---------------------------------------------------------------------------
def _reference(x, dft_matrix, frame_len, frame_hop):
    B, L = x.shape
    T = (L - frame_len) // frame_hop + 1
    idx = jnp.arange(T)[:, None] * frame_hop + jnp.arange(frame_len)[None, :]
    frames = x[:, idx]                                 # (B, T, K)
    stft = frames @ dft_matrix                         # (B, T, 2F)
    F = dft_matrix.shape[1] // 2
    stft_x = jnp.stack([stft[..., :F], stft[..., F:]], axis=1)
    return frames, stft_x


if __name__ == "__main__":
    frame_len, frame_hop = 32, 16
    B = 2
    F = frame_len // 2 + 1

    dft_matrix = init_dft_matrix(frame_len, frame_hop)       # (32, 34)
    key0, key1 = jax.random.split(jax.random.PRNGKey(0))

    # Case 1: L=272 -> T=16 frames, two aligned frame-tiles of 8.
    x = jax.random.normal(key0, (B, 272), dtype=jnp.float32)
    frame_x, stft_x, dft_out = conv_enframe(x, dft_matrix, frame_len, frame_hop,
                                            frames_per_tile=8)
    jax.block_until_ready((frame_x, stft_x, dft_out))

    ref_frames, ref_stft = _reference(x, dft_matrix, frame_len, frame_hop)
    assert frame_x.shape == (B, 16, frame_len)
    assert stft_x.shape == (B, 2, 16, F)
    assert jnp.allclose(frame_x, ref_frames, atol=1e-5, rtol=1e-5)
    assert jnp.allclose(stft_x, ref_stft, atol=2e-3, rtol=1e-3)

    # Case 2: ragged T (L=160 -> T=9); exercises the masked last tile with both
    # the default tile size (single ragged tile) and small tiles (ragged 2nd tile).
    x2 = jax.random.normal(key1, (B, 160), dtype=jnp.float32)
    rf2, rs2 = _reference(x2, dft_matrix, frame_len, frame_hop)
    for fpt in (1024, 8):
        f2, s2, _ = conv_enframe(x2, dft_matrix, frame_len, frame_hop,
                                 frames_per_tile=fpt)
        jax.block_until_ready((f2, s2))
        assert f2.shape == (B, 9, frame_len) and s2.shape == (B, 2, 9, F)
        assert jnp.allclose(f2, rf2, atol=1e-5, rtol=1e-5)
        assert jnp.allclose(s2, rs2, atol=2e-3, rtol=1e-3)

    print("KERNEL_OK")
</pallas_src>

<mosaic_0001>
module attributes {stable_mosaic.version = 11 : i64} {
  func.func @_enframe_stft_kernel(%arg0: i32, %arg1: i32, %arg2: memref<1x8x16xf32, #tpu.memory_space<vmem>>, %arg3: memref<1x1x1x16xf32, #tpu.memory_space<vmem>>, %arg4: memref<32x17xf32, #tpu.memory_space<vmem>>, %arg5: memref<32x17xf32, #tpu.memory_space<vmem>>, %arg6: memref<1x8x32xf32, #tpu.memory_space<vmem>>, %arg7: memref<1x2x8x17xf32, #tpu.memory_space<vmem>>) attributes {dimension_semantics = [#tpu.dimension_semantics<parallel>, #tpu.dimension_semantics<parallel>], iteration_bounds = array<i64: 2, 2>, scalar_prefetch = 0 : i64, scratch_operands = 0 : i64, tpu.core_type = #tpu.core_type<tc>, window_params = [{transform_indices = @transform_0, window_bounds = array<i64: 1, 8, 16>}, {transform_indices = @transform_1, window_bounds = array<i64: 1, 1, 1, 16>}, {pipeline_mode = #tpu.pipeline_mode<synchronous>, transform_indices = @transform_2, window_bounds = array<i64: 32, 17>}, {pipeline_mode = #tpu.pipeline_mode<synchronous>, transform_indices = @transform_3, window_bounds = array<i64: 32, 17>}, {transform_indices = @transform_4, window_bounds = array<i64: 1, 8, 32>}, {transform_indices = @transform_5, window_bounds = array<i64: 1, 2, 8, 17>}]} {
    %c0 = arith.constant 0 : index
    %c0_0 = arith.constant 0 : index
    %c0_1 = arith.constant 0 : index
    %0 = vector.load %arg2[%c0, %c0_0, %c0_1] : memref<1x8x16xf32, #tpu.memory_space<vmem>>, vector<1x8x16xf32>
    %1 = vector.shape_cast %0 : vector<1x8x16xf32> to vector<8x16xf32>
    %c0_2 = arith.constant 0 : index
    %c0_3 = arith.constant 0 : index
    %c0_4 = arith.constant 0 : index
    %2 = vector.load %arg6[%c0_2, %c0_3, %c0_4] : memref<1x8x32xf32, #tpu.memory_space<vmem>>, vector<1x8x16xf32>
    %3 = vector.shape_cast %2 : vector<1x8x16xf32> to vector<8x16xf32>
    %4 = vector.shape_cast %1 : vector<8x16xf32> to vector<1x8x16xf32>
    tpu.vector_store %arg6[%c0_2, %c0_3, %c0_4], %4 {strides = array<i32>} : memref<1x8x32xf32, #tpu.memory_space<vmem>>, vector<1x8x16xf32>,
    %c0_5 = arith.constant 0 : index
    %c0_6 = arith.constant 0 : index
    %5 = vector.load %arg4[%c0_5, %c0_6] : memref<32x17xf32, #tpu.memory_space<vmem>>, vector<16x17xf32>
    %cst = arith.constant dense<0.000000e+00> : vector<8x17xf32>
    %6 = tpu.matmul %1, %5, %cst {dimension_numbers = #tpu.dot_dimension_numbers<[1], [0], [0], [1], [0, 0, 1, 1], [], []>} : vector<8x16xf32>, vector<16x17xf32>, vector<8x17xf32> -> vector<8x17xf32>
    %c0_7 = arith.constant 0 : index
    %c0_8 = arith.constant 0 : index
    %7 = vector.load %arg5[%c0_7, %c0_8] : memref<32x17xf32, #tpu.memory_space<vmem>>, vector<16x17xf32>
    %cst_9 = arith.constant dense<0.000000e+00> : vector<8x17xf32>
    %8 = tpu.matmul %1, %7, %cst_9 {dimension_numbers = #tpu.dot_dimension_numbers<[1], [0], [0], [1], [0, 0, 1, 1], [], []>} : vector<8x16xf32>, vector<16x17xf32>, vector<8x17xf32> -> vector<8x17xf32>
    %c0_10 = arith.constant 0 : index
    %c1 = arith.constant 1 : index
    %c0_11 = arith.constant 0 : index
    %9 = vector.load %arg2[%c0_10, %c1, %c0_11] : memref<1x8x16xf32, #tpu.memory_space<vmem>>, vector<1x7x16xf32>
    %10 = vector.shape_cast %9 : vector<1x7x16xf32> to vector<7x16xf32>
    %c0_12 = arith.constant 0 : index
    %c0_13 = arith.constant 0 : index
    %c0_14 = arith.constant 0 : index
    %c0_15 = arith.constant 0 : index
    %11 = vector.load %arg3[%c0_12, %c0_13, %c0_14, %c0_15] : memref<1x1x1x16xf32, #tpu.memory_space<vmem>>, vector<1x1x1x16xf32>
    %12 = vector.shape_cast %11 : vector<1x1x1x16xf32> to vector<1x16xf32>
    %13 = tpu.concatenate %10, %12 in 0 : vector<7x16xf32>, vector<1x16xf32> -> vector<8x16xf32>
    %c0_16 = arith.constant 0 : index
    %c0_17 = arith.constant 0 : index
    %c16 = arith.constant 16 : index
    %14 = vector.load %arg6[%c0_16, %c0_17, %c16] : memref<1x8x32xf32, #tpu.memory_space<vmem>>, vector<1x8x16xf32>
    %15 = vector.shape_cast %14 : vector<1x8x16xf32> to vector<8x16xf32>
    %16 = vector.shape_cast %13 : vector<8x16xf32> to vector<1x8x16xf32>
    tpu.vector_store %arg6[%c0_16, %c0_17, %c16], %16 {strides = array<i32>} : memref<1x8x32xf32, #tpu.memory_space<vmem>>, vector<1x8x16xf32>,
    %c16_18 = arith.constant 16 : index
    %c0_19 = arith.constant 0 : index
    %17 = vector.load %arg4[%c16_18, %c0_19] : memref<32x17xf32, #tpu.memory_space<vmem>>, vector<16x17xf32>
    %cst_20 = arith.constant dense<0.000000e+00> : vector<8x17xf32>
    %18 = tpu.matmul %13, %17, %cst_20 {dimension_numbers = #tpu.dot_dimension_numbers<[1], [0], [0], [1], [0, 0, 1, 1], [], []>} : vector<8x16xf32>, vector<16x17xf32>, vector<8x17xf32> -> vector<8x17xf32>
    %c16_21 = arith.constant 16 : index
    %c0_22 = arith.constant 0 : index
    %19 = vector.load %arg5[%c16_21, %c0_22] : memref<32x17xf32, #tpu.memory_space<vmem>>, vector<16x17xf32>
    %cst_23 = arith.constant dense<0.000000e+00> : vector<8x17xf32>
    %20 = tpu.matmul %13, %19, %cst_23 {dimension_numbers = #tpu.dot_dimension_numbers<[1], [0], [0], [1], [0, 0, 1, 1], [], []>} : vector<8x16xf32>, vector<16x17xf32>, vector<8x17xf32> -> vector<8x17xf32>
    %21 = arith.addf %6, %18 : vector<8x17xf32>
    %22 = arith.addf %8, %20 : vector<8x17xf32>
    %c0_24 = arith.constant 0 : index
    %c0_25 = arith.constant 0 : index
    %c0_26 = arith.constant 0 : index
    %c0_27 = arith.constant 0 : index
    %23 = vector.load %arg7[%c0_24, %c0_25, %c0_26, %c0_27] : memref<1x2x8x17xf32, #tpu.memory_space<vmem>>, vector<1x1x8x17xf32>
    %24 = vector.shape_cast %23 : vector<1x1x8x17xf32> to vector<8x17xf32>
    %25 = vector.shape_cast %21 : vector<8x17xf32> to vector<1x1x8x17xf32>
    tpu.vector_store %arg7[%c0_24, %c0_25, %c0_26, %c0_27], %25 {strides = array<i32>} : memref<1x2x8x17xf32, #tpu.memory_space<vmem>>, vector<1x1x8x17xf32>,
    %c0_28 = arith.constant 0 : index
    %c1_29 = arith.constant 1 : index
    %c0_30 = arith.constant 0 : index
    %c0_31 = arith.constant 0 : index
    %26 = vector.load %arg7[%c0_28, %c1_29, %c0_30, %c0_31] : memref<1x2x8x17xf32, #tpu.memory_space<vmem>>, vector<1x1x8x17xf32>
    %27 = vector.shape_cast %26 : vector<1x1x8x17xf32> to vector<8x17xf32>
    %28 = vector.shape_cast %22 : vector<8x17xf32> to vector<1x1x8x17xf32>
    tpu.vector_store %arg7[%c0_28, %c1_29, %c0_30, %c0_31], %28 {strides = array<i32>} : memref<1x2x8x17xf32, #tpu.memory_space<vmem>>, vector<1x1x8x17xf32>,
    return
  }
  func.func @transform_0(%arg0: i32, %arg1: i32) -> (i32, i32, i32) {
    %c0_i32 = arith.constant 0 : i32
    %c0_i32_0 = arith.constant 0 : i32
    return %arg0, %arg1, %c0_i32 : i32, i32, i32
  }
  func.func @transform_1(%arg0: i32, %arg1: i32) -> (i32, i32, i32, i32) {
    %c0_i32 = arith.constant 0 : i32
    %c0_i32_0 = arith.constant 0 : i32
    %c0_i32_1 = arith.constant 0 : i32
    return %arg0, %arg1, %c0_i32, %c0_i32_0 : i32, i32, i32, i32
  }
  func.func @transform_2(%arg0: i32, %arg1: i32) -> (i32, i32) {
    %c0_i32 = arith.constant 0 : i32
    %c0_i32_0 = arith.constant 0 : i32
    %c0_i32_1 = arith.constant 0 : i32
    return %c0_i32, %c0_i32_0 : i32, i32
  }
  func.func @transform_3(%arg0: i32, %arg1: i32) -> (i32, i32) {
    %c0_i32 = arith.constant 0 : i32
    %c0_i32_0 = arith.constant 0 : i32
    %c0_i32_1 = arith.constant 0 : i32
    return %c0_i32, %c0_i32_0 : i32, i32
  }
  func.func @transform_4(%arg0: i32, %arg1: i32) -> (i32, i32, i32) {
    %c0_i32 = arith.constant 0 : i32
    %c0_i32_0 = arith.constant 0 : i32
    return %arg0, %arg1, %c0_i32 : i32, i32, i32
  }
  func.func @transform_5(%arg0: i32, %arg1: i32) -> (i32, i32, i32, i32) {
    %c0_i32 = arith.constant 0 : i32
    %c0_i32_0 = arith.constant 0 : i32
    %c0_i32_1 = arith.constant 0 : i32
    return %arg0, %c0_i32, %arg1, %c0_i32_0 : i32, i32, i32, i32
  }
}

</mosaic_0001>

<llo_original>
// kernel: tpu_custom_call.1
$region0: #{tpu_custom_call.1}
  #allocation0 [shape = 'u32[]', space=smem, size = 0x4, offset = 0x4, fixed_abs, tag = 'smem constant byte address 0x4 - core index']
  #allocation1 [shape = 'u32[144,128]{1,0:T(1,128)}', space=vmem, size = 0x12000, scoped, tag = 'internal scratch']
  %s0 = inlined_call_operand.vmem [shape: f32[2,17,16], index: 0, kind: input, shape index: {}]
  %s1 = inlined_call_operand.vmem [shape: f32[2,2,1,16], index: 1, kind: input, shape index: {}]
  %s2 = inlined_call_operand.vmem [shape: f32[32,17], index: 2, kind: input, shape index: {}]
  %s3 = inlined_call_operand.vmem [shape: f32[32,17], index: 3, kind: input, shape index: {}]
  %s4 = inlined_call_operand.hbm [shape: f32[2,16,32], index: 4, kind: output, shape index: {0}]
  %s5 = inlined_call_operand.hbm [shape: f32[2,2,16,17], index: 5, kind: output, shape index: {1}]
  %6 = xla_tuple %s4, %s5
  %s7 = sld [smem:[#allocation0]]
  $region57: #{tpu_custom_call.1} parent=0
    _
  %s9 = ssub.s32 1, %s7
  %s10 = scalar_select 0, %s9, %s7
  $region1: #{tpu_custom_call.1} parent=0
    #allocation2 [shape = 'u8[8192]{0}', space=vmem, size = 0x2000, scoped, tag = 'output window, operand 0']
    #allocation3 [shape = 's32[2]{0}', space=sflag, size = 0x8, scoped, tag = 'scoped memory for tpu_custom_call.1']
    #allocation4 [shape = 'u8[16384]{0}', space=vmem, size = 0x4000, scoped, tag = 'output window, operand 1']
    #allocation5 [shape = 's32[2]{0}', space=sflag, size = 0x8, scoped, tag = 'scoped memory for tpu_custom_call.1']
    %11 = vsyncpa [#allocation3], 0
    %s12 = scalar_lea.sflag [#allocation3], 1
    %13 = vsyncpa %s12, 0
    %14 = vsyncpa [#allocation5], 0
    %s15 = scalar_lea.sflag [#allocation5], 1
    %16 = vsyncpa %s15, 0
    loop: start=0, step=1, limit=6
    $region2: #{tpu_custom_call.1} parent=1 // loop_pre_header
      _
    $region3: #{tpu_custom_call.1} parent=1 // loop_header
      %s18 = sphi 0, %s22
      %p19 = scmp.ge.s32.totalorder %s18, 6
      %s25 = sphi 0, %s37
      %s26 = sphi 0, %s33
      %s27 = sphi 0, %s25
      %s28 = sphi 0, %s26
      %s29 = sphi 0, %s27
      %s30 = sphi 0, %s28
      %s42 = sphi 0, %s44
      %s45 = sphi 0, %s42
      %s46 = sphi 0, %s45
      %s62 = sphi 0, %s46
      %s70 = sphi 0, %s72
      %s73 = sphi 0, %s70
      %s74 = sphi 0, %s73
      %s90 = sphi 0, %s74
      %s94 = sphi 0, %s94
      %s96 = sphi 0, %s94
      %s97 = sphi 0, %s96
      %s111 = sphi 0, %s97
      %s115 = sphi 0, %s115
      %s117 = sphi 0, %s115
      %s118 = sphi 0, %s117
      %s132 = sphi 0, %s118
      %s140 = sphi 0, %s142
      %s143 = sphi 0, %s140
      %s144 = sphi 0, %s143
      %s160 = sphi 0, %s144
      %s168 = sphi 0, %s170
      %s171 = sphi 0, %s168
      %s172 = sphi 0, %s171
      %s188 = sphi 0, %s172
    $region4: #{tpu_custom_call.1} parent=1 // loop_header_branch
      %21 = sbr.rel (%p19) target = $region8
    $region5: #{tpu_custom_call.1} parent=1 // loop_body
      %s23 = ssub.s32 %s18, 1
      %s24 = ssub.s32 %s18, 2
      %s31 = sadd.s32 1, %s26
      %p32 = scmp.ge.s32.totalorder %s31, 2
      %s33 = scalar_select %p32, 0, %s31
      %s34 = sadd.s32 1, %s25
      %s35 = scalar_select %p32, %s34, %s25
      %p36 = scmp.ge.s32.totalorder %s35, 2
      %s37 = scalar_select %p36, 0, %s35
      %s38 = ssub.s32 %s25, %s37
      %s39 = ssub.s32 %s26, %s33
      %s40 = sor.u32 %s38, %s39
      %p41 = scmp.eq.s32.totalorder %s40, 0
      %s43 = sadd.s32 %s42, 1
      %s44 = scalar_select %p41, %s42, %s43
      %p47 = pneg %p41
      %p48 = scmp.eq.s32.totalorder %s18, 3
      %p49 = por %p47, %p48
      %p50 = scmp.ne.s32.totalorder %s42, %s45
      %p51 = scmp.eq.s32.totalorder %s18, 0
      %p52 = por %p50, %p51
      %p53 = scmp.ne.s32.totalorder %s42, %s45
      %p54 = scmp.eq.s32.totalorder %s23, 3
      %p55 = por %p53, %p54
      %p56 = scmp.ne.s32.totalorder %s45, %s46
      %p57 = scmp.eq.s32.totalorder %s23, 0
      %p58 = por %p56, %p57
      %p59 = scmp.ne.s32.totalorder %s45, %s46
      %p60 = scmp.eq.s32.totalorder %s24, 3
      %p61 = por %p59, %p60
      %p63 = scmp.ne.s32.totalorder %s46, %s62
      %p64 = scmp.eq.s32.totalorder %s24, 0
      %p65 = por %p63, %p64
      %s66 = ssub.s32 %s25, %s37
      %s67 = ssub.s32 %s26, %s33
      %s68 = sor.u32 %s66, %s67
      %p69 = scmp.eq.s32.totalorder %s68, 0
      %s71 = sadd.s32 %s70, 1
      %s72 = scalar_select %p69, %s70, %s71
      %p75 = pneg %p69
      %p76 = scmp.eq.s32.totalorder %s18, 3
      %p77 = por %p75, %p76
      %p78 = scmp.ne.s32.totalorder %s70, %s73
      %p79 = scmp.eq.s32.totalorder %s18, 0
      %p80 = por %p78, %p79
      %p81 = scmp.ne.s32.totalorder %s70, %s73
      %p82 = scmp.eq.s32.totalorder %s23, 3
      %p83 = por %p81, %p82
      %p84 = scmp.ne.s32.totalorder %s73, %s74
      %p85 = scmp.eq.s32.totalorder %s23, 0
      %p86 = por %p84, %p85
      %p87 = scmp.ne.s32.totalorder %s73, %s74
      %p88 = scmp.eq.s32.totalorder %s24, 3
      %p89 = por %p87, %p88
      %p91 = scmp.ne.s32.totalorder %s74, %s90
      %p92 = scmp.eq.s32.totalorder %s24, 0
      %p93 = por %p91, %p92
      %s95 = sadd.s32 %s94, 1
      %p98 = scmp.eq.s32.totalorder %s18, 3
      %p99 = scmp.ne.s32.totalorder %s94, %s96
      %p100 = scmp.eq.s32.totalorder %s18, 0
      %p101 = por %p99, %p100
      %p102 = scmp.ne.s32.totalorder %s94, %s96
      %p103 = scmp.eq.s32.totalorder %s23, 3
      %p104 = por %p102, %p103
      %p105 = scmp.ne.s32.totalorder %s96, %s97
      %p106 = scmp.eq.s32.totalorder %s23, 0
      %p107 = por %p105, %p106
      %p108 = scmp.ne.s32.totalorder %s96, %s97
      %p109 = scmp.eq.s32.totalorder %s24, 3
      %p110 = por %p108, %p109
      %p112 = scmp.ne.s32.totalorder %s97, %s111
      %p113 = scmp.eq.s32.totalorder %s24, 0
      %p114 = por %p112, %p113
      %s116 = sadd.s32 %s115, 1
      %p119 = scmp.eq.s32.totalorder %s18, 3
      %p120 = scmp.ne.s32.totalorder %s115, %s117
      %p121 = scmp.eq.s32.totalorder %s18, 0
      %p122 = por %p120, %p121
      %p123 = scmp.ne.s32.totalorder %s115, %s117
      %p124 = scmp.eq.s32.totalorder %s23, 3
      %p125 = por %p123, %p124
      %p126 = scmp.ne.s32.totalorder %s117, %s118
      %p127 = scmp.eq.s32.totalorder %s23, 0
      %p128 = por %p126, %p127
      %p129 = scmp.ne.s32.totalorder %s117, %s118
      %p130 = scmp.eq.s32.totalorder %s24, 3
      %p131 = por %p129, %p130
      %p133 = scmp.ne.s32.totalorder %s118, %s132
      %p134 = scmp.eq.s32.totalorder %s24, 0
      %p135 = por %p133, %p134
      %s136 = ssub.s32 %s25, %s37
      %s137 = ssub.s32 %s26, %s33
      %s138 = sor.u32 %s136, %s137
      %p139 = scmp.eq.s32.totalorder %s138, 0
      %s141 = sadd.s32 %s140, 1
      %s142 = scalar_select %p139, %s140, %s141
      %p145 = pneg %p139
      %p146 = scmp.eq.s32.totalorder %s18, 3
      %p147 = por %p145, %p146
      %p148 = scmp.ne.s32.totalorder %s140, %s143
      %p149 = scmp.eq.s32.totalorder %s18, 0
      %p150 = por %p148, %p149
      %p151 = scmp.ne.s32.totalorder %s140, %s143
      %p152 = scmp.eq.s32.totalorder %s23, 3
      %p153 = por %p151, %p152
      %p154 = scmp.ne.s32.totalorder %s143, %s144
      %p155 = scmp.eq.s32.totalorder %s23, 0
      %p156 = por %p154, %p155
      %p157 = scmp.ne.s32.totalorder %s143, %s144
      %p158 = scmp.eq.s32.totalorder %s24, 3
      %p159 = por %p157, %p158
      %p161 = scmp.ne.s32.totalorder %s144, %s160
      %p162 = scmp.eq.s32.totalorder %s24, 0
      %p163 = por %p161, %p162
      %s164 = ssub.s32 %s25, %s37
      %s165 = ssub.s32 %s26, %s33
      %s166 = sor.u32 %s164, %s165
      %p167 = scmp.eq.s32.totalorder %s166, 0
      %s169 = sadd.s32 %s168, 1
      %s170 = scalar_select %p167, %s168, %s169
      %p173 = pneg %p167
      %p174 = scmp.eq.s32.totalorder %s18, 3
      %p175 = por %p173, %p174
      %p176 = scmp.ne.s32.totalorder %s168, %s171
      %p177 = scmp.eq.s32.totalorder %s18, 0
      %p178 = por %p176, %p177
      %p179 = scmp.ne.s32.totalorder %s168, %s171
      %p180 = scmp.eq.s32.totalorder %s23, 3
      %p181 = por %p179, %p180
      %p182 = scmp.ne.s32.totalorder %s171, %s172
      %p183 = scmp.eq.s32.totalorder %s23, 0
      %p184 = por %p182, %p183
      %p185 = scmp.ne.s32.totalorder %s171, %s172
      %p186 = scmp.eq.s32.totalorder %s24, 3
      %p187 = por %p185, %p186
      %p189 = scmp.ne.s32.totalorder %s172, %s188
      %p190 = scmp.eq.s32.totalorder %s24, 0
      %p191 = por %p189, %p190
      %p192 = scmp.le.s32.totalorder 1, %s18
      %p193 = scmp.lt.s32.totalorder %s18, 5
      %p194 = pnand %p192, %p193
      %p195 = pneg %p194
      // Predicated region
      $region9: #{tpu_custom_call.1} parent=5 // pred_check
        _
      $region10: #{tpu_custom_call.1} parent=5 // pred_check_branch
        %197 = sbr.rel (%p194) target = $region12
      $region11: #{tpu_custom_call.1} parent=5 // pred_region
        %s198 = ssub.s32 %s18, 1
        // Predicated region
        $region13: #{tpu_custom_call.1} parent=11 // pred_check
          %p199 = pneg %p107
        $region14: #{tpu_custom_call.1} parent=11 // pred_check_branch
          %201 = sbr.rel (%p199) target = $region16
        $region15: #{tpu_custom_call.1} parent=11 // pred_region
          _
        $region16: #{tpu_custom_call.1} parent=11 // pred_fallthru
          _
        // Predicated region
        $region17: #{tpu_custom_call.1} parent=11 // pred_check
          %p202 = pneg %p128
        $region18: #{tpu_custom_call.1} parent=11 // pred_check_branch
          %204 = sbr.rel (%p202) target = $region20
        $region19: #{tpu_custom_call.1} parent=11 // pred_region
          _
        $region20: #{tpu_custom_call.1} parent=11 // pred_fallthru
          _
      $region12: #{tpu_custom_call.1} parent=5 // pred_fallthru
        _
      %p205 = scmp.lt.s32.totalorder %s18, 4
      // Predicated region
      $region21: #{tpu_custom_call.1} parent=5 // pred_check
        %p206 = pneg %p205
      $region22: #{tpu_custom_call.1} parent=5 // pred_check_branch
        %208 = sbr.rel (%p206) target = $region24
      $region23: #{tpu_custom_call.1} parent=5 // pred_region
        // Predicated region
        $region25: #{tpu_custom_call.1} parent=23 // pred_check
          %p209 = pneg %p52
        $region26: #{tpu_custom_call.1} parent=23 // pred_check_branch
          %211 = sbr.rel (%p209) target = $region28
        $region27: #{tpu_custom_call.1} parent=23 // pred_region
          %p212 = scmp.lt.s32.totalorder %s25, 1
          %s213 = scalar_select %p212, %s25, 1
          %p214 = scmp.lt.s32.totalorder %s26, 2
          %s215 = scalar_select %p214, %s26, 2
          %s216 = smul.addr %s213, 3
          %s217 = sadd.s32 %s215, %s216
          %s218 = smul.addr %s217, 8
          %s219 = scalar_lea.vmem %s0, %s218
        $region28: #{tpu_custom_call.1} parent=23 // pred_fallthru
          _
        // Predicated region
        $region29: #{tpu_custom_call.1} parent=23 // pred_check
          %p220 = pneg %p80
        $region30: #{tpu_custom_call.1} parent=23 // pred_check_branch
          %222 = sbr.rel (%p220) target = $region32
        $region31: #{tpu_custom_call.1} parent=23 // pred_region
          %p223 = scmp.lt.s32.totalorder %s25, 1
          %s224 = scalar_select %p223, %s25, 1
          %p225 = scmp.lt.s32.totalorder %s26, 1
          %s226 = scalar_select %p225, %s26, 1
          %s227 = smul.addr %s224, 2
          %s228 = sadd.s32 %s226, %s227
          %s229 = scalar_lea.vmem %s1, %s228
        $region32: #{tpu_custom_call.1} parent=23 // pred_fallthru
          _
      $region24: #{tpu_custom_call.1} parent=5 // pred_fallthru
        _
      %p230 = scmp.le.s32.totalorder 1, %s18
      %p231 = scmp.lt.s32.totalorder %s18, 5
      %p232 = pnand %p230, %p231
      %p233 = pneg %p232
      // Predicated region
      $region33: #{tpu_custom_call.1} parent=5 // pred_check
        _
      $region34: #{tpu_custom_call.1} parent=5 // pred_check_branch
        %235 = sbr.rel (%p232) target = $region36
      $region35: #{tpu_custom_call.1} parent=5 // pred_region
        %s236 = ssub.s32 %s18, 1
        %p237 = scmp.lt.s32.totalorder %s27, 1
        %s238 = scalar_select %p237, %s27, 1
        %p239 = scmp.lt.s32.totalorder %s28, 2
        %s240 = scalar_select %p239, %s28, 2
        %s241 = smul.addr %s238, 3
        %s242 = sadd.s32 %s240, %s241
        %s243 = smul.addr %s242, 8
        %s244 = scalar_lea.vmem %s0, %s243
        %p245 = pneg %p58
        %p246 = pneg %p55
        %p247 = scmp.lt.s32.totalorder %s27, 1
        %s248 = scalar_select %p247, %s27, 1
        %p249 = scmp.lt.s32.totalorder %s28, 1
        %s250 = scalar_select %p249, %s28, 1
        %s251 = smul.addr %s248, 2
        %s252 = sadd.s32 %s250, %s251
        %s253 = scalar_lea.vmem %s1, %s252
        %p254 = pneg %p86
        %p255 = pneg %p83
        %p256 = pneg %p107
        %p257 = pneg %p104
        %p258 = pneg %p128
        %p259 = pneg %p125
        %p260 = pneg %p156
        %p261 = pneg %p153
        %s262 = sand.u32 %s143, 1
        %s263 = scalar_lea.sflag [#allocation3], %s262
        %s264 = sand.u32 %s143, 1
        %s265 = smul.addr %s264, 8
        %s266 = scalar_lea.vmem [#allocation2], %s265
        %p267 = pneg %p184
        %p268 = pneg %p181
        %s269 = sand.u32 %s171, 1
        %s270 = scalar_lea.sflag [#allocation5], %s269
        %s271 = sand.u32 %s171, 1
        %s272 = smul.addr %s271, 16
        %s273 = scalar_lea.vmem [#allocation4], %s272
        %p274 = scmp.lt.s32.totalorder %s27, 1
        %s275 = scalar_select %p274, %s27, 1
        %p276 = scmp.lt.s32.totalorder %s28, 2
        %s277 = scalar_select %p276, %s28, 2
        %s278 = smul.addr %s275, 3
        %s279 = sadd.s32 %s277, %s278
        %s280 = smul.addr %s279, 8
        %s281 = scalar_lea.vmem %s0, %s280
        %p282 = scmp.lt.s32.totalorder %s27, 1
        %s283 = scalar_select %p282, %s27, 1
        %p284 = scmp.lt.s32.totalorder %s28, 1
        %s285 = scalar_select %p284, %s28, 1
        %s286 = smul.addr %s283, 2
        %s287 = sadd.s32 %s285, %s286
        %s288 = scalar_lea.vmem %s1, %s287
        %v289 = vld [vmem:[%s281] sm:$0xff]
        %vm290 = vcmask 130048
        %291 = vst.msk [vmem:[%s266] sm:$0xff] %vm290, %v289
        %v292 = vld [vmem:[%s2] sm:$0xff]
        %v293 = vld [vmem:[%s2 + $0x8] sm:$0xff]
        %v294 = vld [vmem:[%s3] sm:$0xff]
        %v295 = vld [vmem:[%s3 + $0x8] sm:$0xff]
        %v296 = vld [vmem:[%s281 + $0x1] sm:$0x7f]
        %v297 = vld [vmem:[%s288] sm:$0x1]
        %v299 = vlaneseq
        %v300 = vshrl.u32 %v299, 7
        %v301 = vsub.s32 0, %v300
        %v302 = vrot.slane %v297, %v301
        %vm304 = vcmask 1046528
        %v305 = vsel %vm304, %v296, %v302
        %307 = vrot.lane.b32.xlu0 %v305, 16
        %v308 = vpop.permute.xlu0 %307
        %vm310 = vcmask 261248
        %311 = vst.msk [vmem:[%s266] sm:$0xff] %vm310, %v308
        %v312 = vld [vmem:[%s2 + $0x10] sm:$0xff]
        %v313 = vld [vmem:[%s2 + $0x18] sm:$0xff]
        %v314 = vsel %vm290, %v305, 0
        %316 = vmatprep.subr.mxu0 0.0
        %317 = vmatpush1.msra.mxu0 0.0
        %318 = vmatprep.subr.mxu0 0.0
        %319 = vmatpush1.msra.mxu0 0.0
        %320 = vmatprep.subr.mxu0 0.0
        %321 = vmatpush1.msra.mxu0 0.0
        %322 = vmatprep.subr.mxu0 0.0
        %323 = vmatpush1.msra.mxu0 0.0
        %324 = vmatprep.subr.mxu0 0.0
        %325 = vmatpush1.msra.mxu0 0.0
        %326 = vmatprep.subr.mxu0 0.0
        %327 = vmatpush1.msra.mxu0 0.0
        %328 = vmatprep.subr.mxu0 0.0
        %329 = vmatpush1.msra.mxu0 0.0
        %330 = vmatprep.subr.mxu0 0.0
        %331 = vmatpush1.msra.mxu0 0.0
        %332 = vmatprep.subr.mxu0 0.0
        %333 = vmatpush1.msra.mxu0 0.0
        %334 = vmatprep.subr.mxu0 0.0
        %335 = vmatpush1.msra.mxu0 0.0
        %336 = vmatprep.subr.mxu0 0.0
        %337 = vmatpush1.msra.mxu0 0.0
        %338 = vmatprep.subr.mxu0 0.0
        %339 = vmatpush1.msra.mxu0 0.0
        %340 = vmatprep.subr.mxu0 0.0
        %341 = vmatpush1.msra.mxu0 0.0
        %342 = vmatprep.subr.mxu0 0.0
        %343 = vmatpush1.msra.mxu0 0.0
        %344 = vmatprep.subr.mxu0 0.0
        %345 = vmatpush1.msra.mxu0 %v313
        %346 = vmatprep.subr.mxu0 0.0
        %347 = vmatpush1.msra.mxu0 %v312
        %348 = vmatprep.subr.mxu0 0.0
        %349 = vmatpush2.msra.mxu0 0.0
        %350 = vmatprep.subr.mxu0 0.0
        %351 = vmatpush2.msra.mxu0 0.0
        %352 = vmatprep.subr.mxu0 0.0
        %353 = vmatpush2.msra.mxu0 0.0
        %354 = vmatprep.subr.mxu0 0.0
        %355 = vmatpush2.msra.mxu0 0.0
        %356 = vmatprep.subr.mxu0 0.0
        %357 = vmatpush2.msra.mxu0 0.0
        %358 = vmatprep.subr.mxu0 0.0
        %359 = vmatpush2.msra.mxu0 0.0
        %360 = vmatprep.subr.mxu0 0.0
        %361 = vmatpush2.msra.mxu0 0.0
        %362 = vmatprep.subr.mxu0 0.0
        %363 = vmatpush2.msra.mxu0 0.0
        %364 = vmatprep.subr.mxu0 0.0
        %365 = vmatpush2.msra.mxu0 0.0
        %366 = vmatprep.subr.mxu0 0.0
        %367 = vmatpush2.msra.mxu0 0.0
        %368 = vmatprep.subr.mxu0 0.0
        %369 = vmatpush2.msra.mxu0 0.0
        %370 = vmatprep.subr.mxu0 0.0
        %371 = vmatpush2.msra.mxu0 0.0
        %372 = vmatprep.subr.mxu0 0.0
        %373 = vmatpush2.msra.mxu0 0.0
        %374 = vmatprep.subr.mxu0 0.0
        %375 = vmatpush2.msra.mxu0 0.0
        %376 = vmatprep.subr.mxu0 0.0
        %377 = vmatpush2.msra.mxu0 0.0
        %378 = vmatprep.subr.mxu0 0.0
        %379 = vmatpush2.msra.mxu0 0.0
        %380 = vmatprep.mubr.f32.mxu0 0.0
        %381 = vmatmul.mubr.f32.gmra.mxu0 %v314
        %v382 = vpop.f32.mrf.mxu0
        %v383 = vadd.f32 0.0, %v382
        %v384 = vpop.f32.mrf.mxu0
        %385 = vdwg.mxu0
        %v386 = vld [vmem:[%s3 + $0x10] sm:$0xff]
        %v387 = vld [vmem:[%s3 + $0x18] sm:$0xff]
        %388 = vmatprep.subr.mxu0 0.0
        %389 = vmatpush1.msra.mxu0 0.0
        %390 = vmatprep.subr.mxu0 0.0
        %391 = vmatpush1.msra.mxu0 0.0
        %392 = vmatprep.subr.mxu0 0.0
        %393 = vmatpush1.msra.mxu0 0.0
        %394 = vmatprep.subr.mxu0 0.0
        %395 = vmatpush1.msra.mxu0 0.0
        %396 = vmatprep.subr.mxu0 0.0
        %397 = vmatpush1.msra.mxu0 0.0
        %398 = vmatprep.subr.mxu0 0.0
        %399 = vmatpush1.msra.mxu0 0.0
        %400 = vmatprep.subr.mxu0 0.0
        %401 = vmatpush1.msra.mxu0 0.0
        %402 = vmatprep.subr.mxu0 0.0
        %403 = vmatpush1.msra.mxu0 0.0
        %404 = vmatprep.subr.mxu0 0.0
        %405 = vmatpush1.msra.mxu0 0.0
        %406 = vmatprep.subr.mxu0 0.0
        %407 = vmatpush1.msra.mxu0 0.0
        %408 = vmatprep.subr.mxu0 0.0
        %409 = vmatpush1.msra.mxu0 0.0
        %410 = vmatprep.subr.mxu0 0.0
        %411 = vmatpush1.msra.mxu0 0.0
        %412 = vmatprep.subr.mxu0 0.0
        %413 = vmatpush1.msra.mxu0 0.0
        %414 = vmatprep.subr.mxu0 0.0
        %415 = vmatpush1.msra.mxu0 0.0
        %416 = vmatprep.subr.mxu0 0.0
        %417 = vmatpush1.msra.mxu0 %v387
        %418 = vmatprep.subr.mxu0 0.0
        %419 = vmatpush1.msra.mxu0 %v386
        %420 = vmatprep.subr.mxu0 0.0
        %421 = vmatpush2.msra.mxu0 0.0
        %422 = vmatprep.subr.mxu0 0.0
        %423 = vmatpush2.msra.mxu0 0.0
        %424 = vmatprep.subr.mxu0 0.0
        %425 = vmatpush2.msra.mxu0 0.0
        %426 = vmatprep.subr.mxu0 0.0
        %427 = vmatpush2.msra.mxu0 0.0
        %428 = vmatprep.subr.mxu0 0.0
        %429 = vmatpush2.msra.mxu0 0.0
        %430 = vmatprep.subr.mxu0 0.0
        %431 = vmatpush2.msra.mxu0 0.0
        %432 = vmatprep.subr.mxu0 0.0
        %433 = vmatpush2.msra.mxu0 0.0
        %434 = vmatprep.subr.mxu0 0.0
        %435 = vmatpush2.msra.mxu0 0.0
        %436 = vmatprep.subr.mxu0 0.0
        %437 = vmatpush2.msra.mxu0 0.0
        %438 = vmatprep.subr.mxu0 0.0
        %439 = vmatpush2.msra.mxu0 0.0
        %440 = vmatprep.subr.mxu0 0.0
        %441 = vmatpush2.msra.mxu0 0.0
        %442 = vmatprep.subr.mxu0 0.0
        %443 = vmatpush2.msra.mxu0 0.0
        %444 = vmatprep.subr.mxu0 0.0
        %445 = vmatpush2.msra.mxu0 0.0
        %446 = vmatprep.subr.mxu0 0.0
        %447 = vmatpush2.msra.mxu0 0.0
        %448 = vmatprep.subr.mxu0 0.0
        %449 = vmatpush2.msra.mxu0 0.0
        %450 = vmatprep.subr.mxu0 0.0
        %451 = vmatpush2.msra.mxu0 0.0
        %452 = vmatprep.mubr.f32.mxu0 0.0
        %453 = vmatmul.mubr.f32.gmra.mxu0 %v314
        %v454 = vpop.f32.mrf.mxu0
        %v455 = vadd.f32 0.0, %v454
        %v456 = vpop.f32.mrf.mxu0
        %457 = vdwg.mxu0
        %v459 = vsel %vm290, %v289, 0
        %461 = vmatprep.subr.mxu0 0.0
        %462 = vmatpush1.msra.mxu0 0.0
        %463 = vmatprep.subr.mxu0 0.0
        %464 = vmatpush1.msra.mxu0 0.0
        %465 = vmatprep.subr.mxu0 0.0
        %466 = vmatpush1.msra.mxu0 0.0
        %467 = vmatprep.subr.mxu0 0.0
        %468 = vmatpush1.msra.mxu0 0.0
        %469 = vmatprep.subr.mxu0 0.0
        %470 = vmatpush1.msra.mxu0 0.0
        %471 = vmatprep.subr.mxu0 0.0
        %472 = vmatpush1.msra.mxu0 0.0
        %473 = vmatprep.subr.mxu0 0.0
        %474 = vmatpush1.msra.mxu0 0.0
        %475 = vmatprep.subr.mxu0 0.0
        %476 = vmatpush1.msra.mxu0 0.0
        %477 = vmatprep.subr.mxu0 0.0
        %478 = vmatpush1.msra.mxu0 0.0
        %479 = vmatprep.subr.mxu0 0.0
        %480 = vmatpush1.msra.mxu0 0.0
        %481 = vmatprep.subr.mxu0 0.0
        %482 = vmatpush1.msra.mxu0 0.0
        %483 = vmatprep.subr.mxu0 0.0
        %484 = vmatpush1.msra.mxu0 0.0
        %485 = vmatprep.subr.mxu0 0.0
        %486 = vmatpush1.msra.mxu0 0.0
        %487 = vmatprep.subr.mxu0 0.0
        %488 = vmatpush1.msra.mxu0 0.0
        %489 = vmatprep.subr.mxu0 0.0
        %490 = vmatpush1.msra.mxu0 %v293
        %491 = vmatprep.subr.mxu0 0.0
        %492 = vmatpush1.msra.mxu0 %v292
        %493 = vmatprep.subr.mxu0 0.0
        %494 = vmatpush2.msra.mxu0 0.0
        %495 = vmatprep.subr.mxu0 0.0
        %496 = vmatpush2.msra.mxu0 0.0
        %497 = vmatprep.subr.mxu0 0.0
        %498 = vmatpush2.msra.mxu0 0.0
        %499 = vmatprep.subr.mxu0 0.0
        %500 = vmatpush2.msra.mxu0 0.0
        %501 = vmatprep.subr.mxu0 0.0
        %502 = vmatpush2.msra.mxu0 0.0
        %503 = vmatprep.subr.mxu0 0.0
        %504 = vmatpush2.msra.mxu0 0.0
        %505 = vmatprep.subr.mxu0 0.0
        %506 = vmatpush2.msra.mxu0 0.0
        %507 = vmatprep.subr.mxu0 0.0
        %508 = vmatpush2.msra.mxu0 0.0
        %509 = vmatprep.subr.mxu0 0.0
        %510 = vmatpush2.msra.mxu0 0.0
        %511 = vmatprep.subr.mxu0 0.0
        %512 = vmatpush2.msra.mxu0 0.0
        %513 = vmatprep.subr.mxu0 0.0
        %514 = vmatpush2.msra.mxu0 0.0
        %515 = vmatprep.subr.mxu0 0.0
        %516 = vmatpush2.msra.mxu0 0.0
        %517 = vmatprep.subr.mxu0 0.0
        %518 = vmatpush2.msra.mxu0 0.0
        %519 = vmatprep.subr.mxu0 0.0
        %520 = vmatpush2.msra.mxu0 0.0
        %521 = vmatprep.subr.mxu0 0.0
        %522 = vmatpush2.msra.mxu0 0.0
        %523 = vmatprep.subr.mxu0 0.0
        %524 = vmatpush2.msra.mxu0 0.0
        %525 = vmatprep.mubr.f32.mxu0 0.0
        %526 = vmatmul.mubr.f32.gmra.mxu0 %v459
        %v527 = vpop.f32.mrf.mxu0
        %v528 = vadd.f32 %v383, %v527
        %v529 = vpop.f32.mrf.mxu0
        %530 = vdwg.mxu0
        %531 = vmatprep.subr.mxu0 0.0
        %532 = vmatpush1.msra.mxu0 0.0
        %533 = vmatprep.subr.mxu0 0.0
        %534 = vmatpush1.msra.mxu0 0.0
        %535 = vmatprep.subr.mxu0 0.0
        %536 = vmatpush1.msra.mxu0 0.0
        %537 = vmatprep.subr.mxu0 0.0
        %538 = vmatpush1.msra.mxu0 0.0
        %539 = vmatprep.subr.mxu0 0.0
        %540 = vmatpush1.msra.mxu0 0.0
        %541 = vmatprep.subr.mxu0 0.0
        %542 = vmatpush1.msra.mxu0 0.0
        %543 = vmatprep.subr.mxu0 0.0
        %544 = vmatpush1.msra.mxu0 0.0
        %545 = vmatprep.subr.mxu0 0.0
        %546 = vmatpush1.msra.mxu0 0.0
        %547 = vmatprep.subr.mxu0 0.0
        %548 = vmatpush1.msra.mxu0 0.0
        %549 = vmatprep.subr.mxu0 0.0
        %550 = vmatpush1.msra.mxu0 0.0
        %551 = vmatprep.subr.mxu0 0.0
        %552 = vmatpush1.msra.mxu0 0.0
        %553 = vmatprep.subr.mxu0 0.0
        %554 = vmatpush1.msra.mxu0 0.0
        %555 = vmatprep.subr.mxu0 0.0
        %556 = vmatpush1.msra.mxu0 0.0
        %557 = vmatprep.subr.mxu0 0.0
        %558 = vmatpush1.msra.mxu0 0.0
        %559 = vmatprep.subr.mxu0 0.0
        %560 = vmatpush1.msra.mxu0 %v295
        %561 = vmatprep.subr.mxu0 0.0
        %562 = vmatpush1.msra.mxu0 %v294
        %563 = vmatprep.subr.mxu0 0.0
        %564 = vmatpush2.msra.mxu0 0.0
        %565 = vmatprep.subr.mxu0 0.0
        %566 = vmatpush2.msra.mxu0 0.0
        %567 = vmatprep.subr.mxu0 0.0
        %568 = vmatpush2.msra.mxu0 0.0
        %569 = vmatprep.subr.mxu0 0.0
        %570 = vmatpush2.msra.mxu0 0.0
        %571 = vmatprep.subr.mxu0 0.0
        %572 = vmatpush2.msra.mxu0 0.0
        %573 = vmatprep.subr.mxu0 0.0
        %574 = vmatpush2.msra.mxu0 0.0
        %575 = vmatprep.subr.mxu0 0.0
        %576 = vmatpush2.msra.mxu0 0.0
        %577 = vmatprep.subr.mxu0 0.0
        %578 = vmatpush2.msra.mxu0 0.0
        %579 = vmatprep.subr.mxu0 0.0
        %580 = vmatpush2.msra.mxu0 0.0
        %581 = vmatprep.subr.mxu0 0.0
        %582 = vmatpush2.msra.mxu0 0.0
        %583 = vmatprep.subr.mxu0 0.0
        %584 = vmatpush2.msra.mxu0 0.0
        %585 = vmatprep.subr.mxu0 0.0
        %586 = vmatpush2.msra.mxu0 0.0
        %587 = vmatprep.subr.mxu0 0.0
        %588 = vmatpush2.msra.mxu0 0.0
        %589 = vmatprep.subr.mxu0 0.0
        %590 = vmatpush2.msra.mxu0 0.0
        %591 = vmatprep.subr.mxu0 0.0
        %592 = vmatpush2.msra.mxu0 0.0
        %593 = vmatprep.subr.mxu0 0.0
        %594 = vmatpush2.msra.mxu0 0.0
        %595 = vmatprep.mubr.f32.mxu0 0.0
        %596 = vmatmul.mubr.f32.gmra.mxu0 %v459
        %v597 = vpop.f32.mrf.mxu0
        %v598 = vadd.f32 %v455, %v597
        %v599 = vpop.f32.mrf.mxu0
        %600 = vdwg.mxu0
        %vm601 = vcmask 138240
        %602 = vst.msk [vmem:[%s273] sm:$0xff] %vm601, %v528
        %s603 = scalar_lea.vmem %s273, 8 [#allocation4]
        %604 = vst.msk [vmem:[%s603] sm:$0xff] %vm601, %v598
        %s605 = sand.u32 %s143, 1
        %s606 = scalar_lea.sflag [#allocation3], %s605
        %s607 = sand.u32 %s143, 1
        %s608 = smul.addr %s607, 8
        %s609 = scalar_lea.vmem [#allocation2], %s608
        %s610 = sand.u32 %s171, 1
        %s611 = scalar_lea.sflag [#allocation5], %s610
        %s612 = sand.u32 %s171, 1
        %s613 = smul.addr %s612, 16
        %s614 = scalar_lea.vmem [#allocation4], %s613
        // Predicated region
        $region37: #{tpu_custom_call.1} parent=35 // pred_check
          %p615 = pneg %p153
        $region38: #{tpu_custom_call.1} parent=35 // pred_check_branch
          %617 = sbr.rel (%p615) target = $region40
        $region39: #{tpu_custom_call.1} parent=35 // pred_region
          %s619 = ssub.s32 128, 128
          %620 = vsyncadd %s606, %s619
          %s621 = smul.addr %s27, 2
          %s622 = sadd.s32 %s28, %s621
          %s623 = smul.addr %s622, 128
          %s624 = scalar_lea.hbm %s4, %s623
          %s626 = sshll.u32 %s609, 4
          %s627 = int_to_ptr.vmem [resolvable:$true] %s626
          %629 = dma.vmem_to_hbm [thread:$0]  %s627, 128, %s624, %s606
        $region40: #{tpu_custom_call.1} parent=35 // pred_fallthru
          _
        // Predicated region
        $region41: #{tpu_custom_call.1} parent=35 // pred_check
          %p630 = pneg %p181
        $region42: #{tpu_custom_call.1} parent=35 // pred_check_branch
          %632 = sbr.rel (%p630) target = $region44
        $region43: #{tpu_custom_call.1} parent=35 // pred_region
          %s634 = ssub.s32 256, 256
          %635 = vsyncadd %s611, %s634
          %s636 = smul.addr %s27, 4
          %s637 = sadd.s32 %s28, %s636
          %s638 = smul.addr %s637, 128
          %s639 = scalar_lea.hbm %s5, %s638
          %s640 = sshll.u32 %s614, 4
          %s641 = int_to_ptr.vmem [resolvable:$true] %s640
          %646 = dma.vmem_to_hbm [thread:$0]  %s641, 256, %s639, %s611, 128, 256, 8
        $region44: #{tpu_custom_call.1} parent=35 // pred_fallthru
          _
      $region36: #{tpu_custom_call.1} parent=5 // pred_fallthru
        _
      %p647 = scmp.le.s32.totalorder 2, %s18
      // Predicated region
      $region45: #{tpu_custom_call.1} parent=5 // pred_check
        %p648 = pneg %p647
      $region46: #{tpu_custom_call.1} parent=5 // pred_check_branch
        %650 = sbr.rel (%p648) target = $region48
      $region47: #{tpu_custom_call.1} parent=5 // pred_region
        %s651 = ssub.s32 %s18, 2
        // Predicated region
        $region49: #{tpu_custom_call.1} parent=47 // pred_check
          %p652 = pneg %p159
        $region50: #{tpu_custom_call.1} parent=47 // pred_check_branch
          %654 = sbr.rel (%p652) target = $region52
        $region51: #{tpu_custom_call.1} parent=47 // pred_region
          %s655 = sand.u32 %s144, 1
          %s656 = scalar_lea.sflag [#allocation3], %s655
          %s657 = sand.u32 %s144, 1
          %s658 = smul.addr %s657, 8
          %s659 = scalar_lea.vmem [#allocation2], %s658
          %660 = dma.done %s656, 128
        $region52: #{tpu_custom_call.1} parent=47 // pred_fallthru
          _
        // Predicated region
        $region53: #{tpu_custom_call.1} parent=47 // pred_check
          %p661 = pneg %p187
        $region54: #{tpu_custom_call.1} parent=47 // pred_check_branch
          %663 = sbr.rel (%p661) target = $region56
        $region55: #{tpu_custom_call.1} parent=47 // pred_region
          %s664 = sand.u32 %s172, 1
          %s665 = scalar_lea.sflag [#allocation5], %s664
          %s666 = sand.u32 %s172, 1
          %s667 = smul.addr %s666, 16
          %s668 = scalar_lea.vmem [#allocation4], %s667
          %669 = dma.done %s665, 256
        $region56: #{tpu_custom_call.1} parent=47 // pred_fallthru
          _
      $region48: #{tpu_custom_call.1} parent=5 // pred_fallthru
        _
    $region6: #{tpu_custom_call.1} parent=1 // loop_footer
      %s22 = sadd.s32 1, %s18
    $region7: #{tpu_custom_call.1} parent=1 // loop_footer_branch
      %17 = sbr.rel target = $region3
    $region8: #{tpu_custom_call.1} parent=1 // loop_exit
      _
    %670 = vsyncpa [#allocation3], 1
    %s671 = scalar_lea.sflag [#allocation3], 1
    %672 = vsyncpa %s671, 1
    %673 = vsyncpa [#allocation5], 1
    %s674 = scalar_lea.sflag [#allocation5], 1
    %675 = vsyncpa %s674, 1

</llo_original>
